<compile_context>
chip_gen: v6e
topology: v6e:2x2x1
jax: 0.10.0
libtpu: 0.0.40
codegen_flags: <defaults>
</compile_context>

<pallas_src>
import jax
import jax.numpy as jnp
from jax.experimental import pallas as pl
from jax.experimental.pallas import tpu as pltpu

NEG_SLOPE = 0.2          # GATConv default negative_slope
IN_CHANNELS = 151        # module default
HID_CHANNELS = 64        # module default
H_PAD = 128              # lane-dense padded hidden size
NODES_PER_GRAPH = 128    # implied by nn.Linear(128 * hid_channels, 1)


# ----------------------------- Pallas kernel -------------------------------

def gat_graph_kernel(x_ref, maskb_ref, w_ref, att_src_ref, att_dst_ref,
                     conv_bias_ref, lin_w_ref, lin_b_ref, o_ref):
    """One grid step = one graph (128 nodes): GATConv + ReLU + lin1 + sigmoid.

    x_ref        : [1, 128, Cin]  bf16 node features of this graph
    maskb_ref    : [1, 128, 128]  f32 additive mask: 0 for edge j->i (+self-loop),
                                  -1e30 otherwise
    w_ref        : [Cin, 128]     bf16 projection (columns >= 64 are zero padding)
    att_src_ref  : [1, 128]       f32 attention vector (source), zero padded
    att_dst_ref  : [1, 128]       f32 attention vector (dest),   zero padded
    conv_bias_ref: [1, 128]       f32 GATConv bias, zero padded
    lin_w_ref    : [128, 128]     f32 lin1 weight reshaped to [node, feat], zero padded
    lin_b_ref    : [1, 1]         f32 lin1 bias
    o_ref        : [1, 1, 128]    f32 sigmoid(lin1(flatten(relu(conv)))) broadcast on lanes
    """
    x = x_ref[0]                                                    # [128, Cin] bf16

    # Node projection (MXU, bf16 operands, f32 accumulation).
    h = jnp.dot(x, w_ref[...], preferred_element_type=jnp.float32)  # [128, 128] f32

    # Per-node attention logits (f32).
    a_src = jnp.sum(h * att_src_ref[...], axis=-1, keepdims=True)   # [128, 1]
    a_dst = jnp.sum(h * att_dst_ref[...], axis=-1, keepdims=True)   # [128, 1]

    # e[i, j] = leaky_relu(a_dst[i] + a_src[j]) + mask_bias[i, j]
    e = a_dst + a_src.T                                              # [128, 128]
    e = jnp.where(e > 0, e, NEG_SLOPE * e)
    e = e + maskb_ref[0]                                             # additive -1e30 mask

    # Softmax over incoming neighbours (self-loops guarantee a finite max per row;
    # masked entries underflow to exactly 0 after exp).
    e_max = jnp.max(e, axis=-1, keepdims=True)
    p = jnp.exp(e - e_max)
    denom = jnp.sum(p, axis=-1, keepdims=True)
    attn = p * pl.reciprocal(denom, approx=True)                     # [128, 128]

    # Weighted aggregation (MXU, bf16 operands, f32 acc) + bias + ReLU.
    agg = jnp.dot(attn.astype(jnp.bfloat16), h.astype(jnp.bfloat16),
                  preferred_element_type=jnp.float32)
    relu_h = jnp.maximum(agg + conv_bias_ref[...], 0.0)              # [128, 128]

    # Fused readout: lin1 over the per-graph flatten, then sigmoid.
    prod = relu_h * lin_w_ref[...]
    y = jnp.sum(jnp.sum(prod, axis=-1, keepdims=True),
                axis=0, keepdims=True) + lin_b_ref[...]              # [1, 1]
    sig = 1.0 / (1.0 + jnp.exp(-y))
    o_ref[0] = jnp.broadcast_to(sig, (1, 128))                        # lane-dense store


# ------------------------------- wrappers ----------------------------------

def gat_fused(x3, mask_bias, w_p, att_src_p, att_dst_p, bias_p, lin_w_p, lin_b):
    b, n, cin = x3.shape
    hp = w_p.shape[1]
    out = pl.pallas_call(
        gat_graph_kernel,
        out_shape=jax.ShapeDtypeStruct((b, 1, 128), jnp.float32),
        grid=(b,),
        in_specs=[
            pl.BlockSpec((1, n, cin), lambda g: (g, 0, 0)),
            pl.BlockSpec((1, n, n), lambda g: (g, 0, 0)),
            pl.BlockSpec((cin, hp), lambda g: (0, 0)),
            pl.BlockSpec((1, hp), lambda g: (0, 0)),
            pl.BlockSpec((1, hp), lambda g: (0, 0)),
            pl.BlockSpec((1, hp), lambda g: (0, 0)),
            pl.BlockSpec((n, hp), lambda g: (0, 0)),
            pl.BlockSpec((1, 1), lambda g: (0, 0)),
        ],
        out_specs=pl.BlockSpec((1, 1, 128), lambda g: (g, 0, 0)),
        compiler_params=pltpu.CompilerParams(
            dimension_semantics=("parallel",)),
    )(x3, mask_bias, w_p, att_src_p, att_dst_p, bias_p, lin_w_p, lin_b)
    return out[:, 0, :1]                                              # [B, 1]


def prepare_params(params):
    """Pad H 64->128 lanes, cast MXU weights to bf16, reshape lin_w to [node, feat]."""
    pad = ((0, 0), (0, H_PAD - HID_CHANNELS))
    w_p = jnp.pad(params["w1"], pad).astype(jnp.bfloat16)
    att_src_p = jnp.pad(params["att_src1"], pad)
    att_dst_p = jnp.pad(params["att_dst1"], pad)
    bias_p = jnp.pad(params["bias1"], pad)
    lin_w_p = jnp.pad(params["lin_w"].reshape(NODES_PER_GRAPH, HID_CHANNELS), pad)
    return w_p, att_src_p, att_dst_p, bias_p, lin_w_p, params["lin_b"]


def gat_forward(x, edge_index, batch, params):
    """Full GAT forward (num_layers=1 -> single GATConv), jittable."""
    del batch  # contiguous 128-nodes-per-graph layout assumed (see TODO below)
    n, cin = x.shape
    num_graphs = n // NODES_PER_GRAPH  # static, no host sync

    # Per-graph additive attention mask (edges are strictly intra-graph):
    # 0 where edge src->dst exists (plus self-loops: add_self_loops=True), else -1e30.
    # TODO(synk): duplicate edges collapse to a single entry (PyG's edge-list softmax
    # would count them twice).
    src, dst = edge_index[0], edge_index[1]
    g = dst // NODES_PER_GRAPH
    dl = dst % NODES_PER_GRAPH
    sl = src % NODES_PER_GRAPH
    mask_bias = jnp.full((num_graphs, NODES_PER_GRAPH, NODES_PER_GRAPH),
                         -1e30, jnp.float32)
    mask_bias = mask_bias.at[g, dl, sl].set(0.0)
    diag = jnp.arange(NODES_PER_GRAPH)
    mask_bias = mask_bias.at[:, diag, diag].set(0.0)

    # TODO(synk): `linearize` is not defined in the reference; contiguous
    # 128-nodes-per-graph flatten is assumed.
    x3 = x.reshape(num_graphs, NODES_PER_GRAPH, cin).astype(jnp.bfloat16)

    w_p, a_s, a_d, b_p, lw_p, lb = prepare_params(params)
    return gat_fused(x3, mask_bias, w_p, a_s, a_d, b_p, lw_p, lb)


def gat_reference(x, edge_index, params):
    """Pure-JAX f32 reference for the same semantics (dense adjacency)."""
    n = x.shape[0]
    num_graphs = n // NODES_PER_GRAPH
    h = x @ params["w1"]
    a_src = jnp.sum(h * params["att_src1"], axis=-1)
    a_dst = jnp.sum(h * params["att_dst1"], axis=-1)
    src, dst = edge_index[0], edge_index[1]
    adj = jnp.zeros((n, n), jnp.float32).at[dst, src].set(1.0)
    adj = jnp.maximum(adj, jnp.eye(n, dtype=jnp.float32))
    e = a_dst[:, None] + a_src[None, :]
    e = jnp.where(e > 0, e, NEG_SLOPE * e)
    e = jnp.where(adj > 0, e, -jnp.inf)
    attn = jax.nn.softmax(e, axis=-1)
    relu_h = jnp.maximum(attn @ h + params["bias1"], 0.0)
    xg = relu_h.reshape(num_graphs, NODES_PER_GRAPH * HID_CHANNELS)
    return jax.nn.sigmoid(xg @ params["lin_w"] + params["lin_b"])


# ------------------------------ parameters ---------------------------------

def init_params(key):
    k1, k2, k3, k4, k5 = jax.random.split(key, 5)
    scale_w = 1.0 / jnp.sqrt(jnp.float32(IN_CHANNELS))
    scale_l = 1.0 / jnp.sqrt(jnp.float32(NODES_PER_GRAPH * HID_CHANNELS))
    return {
        "w1": (jax.random.normal(k1, (IN_CHANNELS, HID_CHANNELS), jnp.float32)
               * scale_w),
        "att_src1": jax.random.normal(k2, (1, HID_CHANNELS), jnp.float32) * 0.1,
        "att_dst1": jax.random.normal(k3, (1, HID_CHANNELS), jnp.float32) * 0.1,
        "bias1": jnp.zeros((1, HID_CHANNELS), jnp.float32),
        "lin_w": (jax.random.normal(k4, (NODES_PER_GRAPH * HID_CHANNELS, 1),
                                    jnp.float32) * scale_l),
        "lin_b": jax.random.normal(k5, (1, 1), jnp.float32) * 0.01,
    }


# --------------------------------- main -------------------------------------

if __name__ == "__main__":
    key = jax.random.PRNGKey(0)
    pkey, xkey, skey, dkey = jax.random.split(key, 4)

    params = init_params(pkey)

    num_graphs = 2
    n_nodes = num_graphs * NODES_PER_GRAPH            # 256
    edges_per_graph = 512

    # Node features [N, 151].
    x = jax.random.normal(xkey, (n_nodes, IN_CHANNELS), jnp.float32)

    # Random intra-graph edges, then offset per graph.
    src_local = jax.random.randint(skey, (num_graphs, edges_per_graph),
                                   0, NODES_PER_GRAPH)
    dst_local = jax.random.randint(dkey, (num_graphs, edges_per_graph),
                                   0, NODES_PER_GRAPH)
    offsets = (jnp.arange(num_graphs) * NODES_PER_GRAPH)[:, None]
    edge_index = jnp.stack([(src_local + offsets).ravel(),
                            (dst_local + offsets).ravel()], axis=0)  # [2, E]

    # batch vector: graph id per node.
    batch = jnp.repeat(jnp.arange(num_graphs, dtype=jnp.int32),
                       NODES_PER_GRAPH)

    fwd = jax.jit(gat_forward)
    out = fwd(x, edge_index, batch, params)
    out = jax.block_until_ready(out)

    assert out.shape == (num_graphs, 1)
    assert bool(jnp.all(jnp.isfinite(out)))
    assert bool(jnp.all((out >= 0.0) & (out <= 1.0)))

    ref = gat_reference(x, edge_index, params)
    assert bool(jnp.allclose(out, ref, atol=0.1)), (out, ref)

    print("KERNEL_OK")
</pallas_src>

<mosaic_0001>
module attributes {stable_mosaic.version = 11 : i64} {
  func.func @gat_graph_kernel(%arg0: i32, %arg1: memref<1x128x151xbf16, #tpu.memory_space<vmem>>, %arg2: memref<1x128x128xf32, #tpu.memory_space<vmem>>, %arg3: memref<151x128xbf16, #tpu.memory_space<vmem>>, %arg4: memref<1x128xf32, #tpu.memory_space<vmem>>, %arg5: memref<1x128xf32, #tpu.memory_space<vmem>>, %arg6: memref<1x128xf32, #tpu.memory_space<vmem>>, %arg7: memref<128x128xf32, #tpu.memory_space<vmem>>, %arg8: memref<1x1xf32, #tpu.memory_space<vmem>>, %arg9: memref<1x1x128xf32, #tpu.memory_space<vmem>>) attributes {dimension_semantics = [#tpu.dimension_semantics<parallel>], iteration_bounds = array<i64: 2>, scalar_prefetch = 0 : i64, scratch_operands = 0 : i64, tpu.core_type = #tpu.core_type<tc>, window_params = [{transform_indices = @transform_0, window_bounds = array<i64: 1, 128, 151>}, {transform_indices = @transform_1, window_bounds = array<i64: 1, 128, 128>}, {pipeline_mode = #tpu.pipeline_mode<synchronous>, transform_indices = @transform_2, window_bounds = array<i64: 151, 128>}, {pipeline_mode = #tpu.pipeline_mode<synchronous>, transform_indices = @transform_3, window_bounds = array<i64: 1, 128>}, {pipeline_mode = #tpu.pipeline_mode<synchronous>, transform_indices = @transform_4, window_bounds = array<i64: 1, 128>}, {pipeline_mode = #tpu.pipeline_mode<synchronous>, transform_indices = @transform_5, window_bounds = array<i64: 1, 128>}, {pipeline_mode = #tpu.pipeline_mode<synchronous>, transform_indices = @transform_6, window_bounds = array<i64: 128, 128>}, {pipeline_mode = #tpu.pipeline_mode<synchronous>, transform_indices = @transform_7, window_bounds = array<i64: 1, 1>}, {transform_indices = @transform_8, window_bounds = array<i64: 1, 1, 128>}]} {
    %c0 = arith.constant 0 : index
    %c0_0 = arith.constant 0 : index
    %c0_1 = arith.constant 0 : index
    %0 = vector.load %arg1[%c0, %c0_0, %c0_1] : memref<1x128x151xbf16, #tpu.memory_space<vmem>>, vector<1x128x151xbf16>
    %1 = vector.shape_cast %0 : vector<1x128x151xbf16> to vector<128x151xbf16>
    %c0_2 = arith.constant 0 : index
    %c0_3 = arith.constant 0 : index
    %2 = vector.load %arg3[%c0_2, %c0_3] : memref<151x128xbf16, #tpu.memory_space<vmem>>, vector<151x128xbf16>
    %cst = arith.constant dense<0.000000e+00> : vector<128x128xf32>
    %3 = tpu.matmul %1, %2, %cst {dimension_numbers = #tpu.dot_dimension_numbers<[1], [0], [0], [1], [0, 0, 1, 1], [], []>} : vector<128x151xbf16>, vector<151x128xbf16>, vector<128x128xf32> -> vector<128x128xf32>
    %c0_4 = arith.constant 0 : index
    %c0_5 = arith.constant 0 : index
    %4 = vector.load %arg4[%c0_4, %c0_5] : memref<1x128xf32, #tpu.memory_space<vmem>>, vector<1x128xf32>
    %5 = vector.broadcast %4 : vector<1x128xf32> to vector<128x128xf32>
    %6 = arith.mulf %3, %5 : vector<128x128xf32>
    %cst_6 = arith.constant dense<0.000000e+00> : vector<128xf32>
    %7 = vector.multi_reduction <add>, %6, %cst_6 [1] : vector<128x128xf32> to vector<128xf32>
    %8 = vector.shape_cast %7 : vector<128xf32> to vector<128x1xf32>
    %c0_7 = arith.constant 0 : index
    %c0_8 = arith.constant 0 : index
    %9 = vector.load %arg5[%c0_7, %c0_8] : memref<1x128xf32, #tpu.memory_space<vmem>>, vector<1x128xf32>
    %10 = vector.broadcast %9 : vector<1x128xf32> to vector<128x128xf32>
    %11 = arith.mulf %3, %10 : vector<128x128xf32>
    %cst_9 = arith.constant dense<0.000000e+00> : vector<128xf32>
    %12 = vector.multi_reduction <add>, %11, %cst_9 [1] : vector<128x128xf32> to vector<128xf32>
    %13 = vector.shape_cast %12 : vector<128xf32> to vector<128x1xf32>
    %14 = tpu.transpose %8, [1, 0] : vector<128x1xf32> -> vector<1x128xf32>
    %15 = vector.broadcast %13 : vector<128x1xf32> to vector<128x128xf32>
    %16 = vector.broadcast %14 : vector<1x128xf32> to vector<128x128xf32>
    %17 = arith.addf %15, %16 : vector<128x128xf32>
    %cst_10 = arith.constant 0.000000e+00 : f32
    %18 = vector.broadcast %cst_10 : f32 to vector<128x128xf32>
    %19 = arith.cmpf ogt, %17, %18 : vector<128x128xf32>
    %cst_11 = arith.constant 2.000000e-01 : f32
    %20 = vector.broadcast %cst_11 : f32 to vector<128x128xf32>
    %21 = arith.mulf %20, %17 : vector<128x128xf32>
    %22 = arith.select %19, %17, %21 : vector<128x128xi1>, vector<128x128xf32>
    %c0_12 = arith.constant 0 : index
    %c0_13 = arith.constant 0 : index
    %c0_14 = arith.constant 0 : index
    %23 = vector.load %arg2[%c0_12, %c0_13, %c0_14] : memref<1x128x128xf32, #tpu.memory_space<vmem>>, vector<1x128x128xf32>
    %24 = vector.shape_cast %23 : vector<1x128x128xf32> to vector<128x128xf32>
    %25 = arith.addf %22, %24 : vector<128x128xf32>
    %cst_15 = arith.constant dense<0xFF800000> : vector<128xf32>
    %26 = vector.multi_reduction <maximumf>, %25, %cst_15 [1] : vector<128x128xf32> to vector<128xf32>
    %27 = vector.shape_cast %26 : vector<128xf32> to vector<128x1xf32>
    %28 = vector.broadcast %27 : vector<128x1xf32> to vector<128x128xf32>
    %29 = arith.subf %25, %28 : vector<128x128xf32>
    %30 = math.exp %29 : vector<128x128xf32>
    %cst_16 = arith.constant dense<0.000000e+00> : vector<128xf32>
    %31 = vector.multi_reduction <add>, %30, %cst_16 [1] : vector<128x128xf32> to vector<128xf32>
    %32 = vector.shape_cast %31 : vector<128xf32> to vector<128x1xf32>
    %33 = tpu.reciprocal %32 {approx = true} : vector<128x1xf32> -> vector<128x1xf32>
    %34 = vector.broadcast %33 : vector<128x1xf32> to vector<128x128xf32>
    %35 = arith.mulf %30, %34 : vector<128x128xf32>
    %36 = arith.truncf %35 : vector<128x128xf32> to vector<128x128xbf16>
    %37 = arith.truncf %3 : vector<128x128xf32> to vector<128x128xbf16>
    %cst_17 = arith.constant dense<0.000000e+00> : vector<128x128xf32>
    %38 = tpu.matmul %36, %37, %cst_17 {dimension_numbers = #tpu.dot_dimension_numbers<[1], [0], [0], [1], [0, 0, 1, 1], [], []>} : vector<128x128xbf16>, vector<128x128xbf16>, vector<128x128xf32> -> vector<128x128xf32>
    %c0_18 = arith.constant 0 : index
    %c0_19 = arith.constant 0 : index
    %39 = vector.load %arg6[%c0_18, %c0_19] : memref<1x128xf32, #tpu.memory_space<vmem>>, vector<1x128xf32>
    %40 = vector.broadcast %39 : vector<1x128xf32> to vector<128x128xf32>
    %41 = arith.addf %38, %40 : vector<128x128xf32>
    %cst_20 = arith.constant 0.000000e+00 : f32
    %42 = vector.broadcast %cst_20 : f32 to vector<128x128xf32>
    %43 = arith.maximumf %41, %42 : vector<128x128xf32>
    %c0_21 = arith.constant 0 : index
    %c0_22 = arith.constant 0 : index
    %44 = vector.load %arg7[%c0_21, %c0_22] : memref<128x128xf32, #tpu.memory_space<vmem>>, vector<128x128xf32>
    %45 = arith.mulf %43, %44 : vector<128x128xf32>
    %cst_23 = arith.constant dense<0.000000e+00> : vector<128xf32>
    %46 = vector.multi_reduction <add>, %45, %cst_23 [1] : vector<128x128xf32> to vector<128xf32>
    %47 = vector.shape_cast %46 : vector<128xf32> to vector<128x1xf32>
    %cst_24 = arith.constant dense<0.000000e+00> : vector<1xf32>
    %48 = vector.multi_reduction <add>, %47, %cst_24 [0] : vector<128x1xf32> to vector<1xf32>
    %49 = vector.shape_cast %48 : vector<1xf32> to vector<1x1xf32>
    %c0_25 = arith.constant 0 : index
    %c0_26 = arith.constant 0 : index
    %50 = vector.load %arg8[%c0_25, %c0_26] : memref<1x1xf32, #tpu.memory_space<vmem>>, vector<1x1xf32>
    %51 = arith.addf %49, %50 : vector<1x1xf32>
    %cst_27 = arith.constant 0.000000e+00 : f32
    %52 = vector.broadcast %cst_27 : f32 to vector<1x1xf32>
    %53 = arith.subf %52, %51 : vector<1x1xf32>
    %54 = math.exp %53 : vector<1x1xf32>
    %cst_28 = arith.constant 1.000000e+00 : f32
    %55 = vector.broadcast %cst_28 : f32 to vector<1x1xf32>
    %56 = arith.addf %55, %54 : vector<1x1xf32>
    %cst_29 = arith.constant 1.000000e+00 : f32
    %57 = vector.broadcast %cst_29 : f32 to vector<1x1xf32>
    %58 = arith.divf %57, %56 : vector<1x1xf32>
    %59 = vector.shape_cast %58 : vector<1x1xf32> to vector<1x1xf32>
    %60 = vector.broadcast %59 : vector<1x1xf32> to vector<1x128xf32>
    %c0_30 = arith.constant 0 : index
    %c0_31 = arith.constant 0 : index
    %c0_32 = arith.constant 0 : index
    %61 = vector.load %arg9[%c0_30, %c0_31, %c0_32] : memref<1x1x128xf32, #tpu.memory_space<vmem>>, vector<1x1x128xf32>
    %62 = vector.shape_cast %61 : vector<1x1x128xf32> to vector<1x128xf32>
    %63 = vector.shape_cast %60 : vector<1x128xf32> to vector<1x1x128xf32>
    tpu.vector_store %arg9[%c0_30, %c0_31, %c0_32], %63 {strides = array<i32>} : memref<1x1x128xf32, #tpu.memory_space<vmem>>, vector<1x1x128xf32>,
    return
  }
  func.func @transform_0(%arg0: i32) -> (i32, i32, i32) {
    %c0_i32 = arith.constant 0 : i32
    %c0_i32_0 = arith.constant 0 : i32
    %c0_i32_1 = arith.constant 0 : i32
    return %arg0, %c0_i32, %c0_i32_0 : i32, i32, i32
  }
  func.func @transform_1(%arg0: i32) -> (i32, i32, i32) {
    %c0_i32 = arith.constant 0 : i32
    %c0_i32_0 = arith.constant 0 : i32
    %c0_i32_1 = arith.constant 0 : i32
    return %arg0, %c0_i32, %c0_i32_0 : i32, i32, i32
  }
  func.func @transform_2(%arg0: i32) -> (i32, i32) {
    %c0_i32 = arith.constant 0 : i32
    %c0_i32_0 = arith.constant 0 : i32
    %c0_i32_1 = arith.constant 0 : i32
    return %c0_i32, %c0_i32_0 : i32, i32
  }
  func.func @transform_3(%arg0: i32) -> (i32, i32) {
    %c0_i32 = arith.constant 0 : i32
    %c0_i32_0 = arith.constant 0 : i32
    %c0_i32_1 = arith.constant 0 : i32
    return %c0_i32, %c0_i32_0 : i32, i32
  }
  func.func @transform_4(%arg0: i32) -> (i32, i32) {
    %c0_i32 = arith.constant 0 : i32
    %c0_i32_0 = arith.constant 0 : i32
    %c0_i32_1 = arith.constant 0 : i32
    return %c0_i32, %c0_i32_0 : i32, i32
  }
  func.func @transform_5(%arg0: i32) -> (i32, i32) {
    %c0_i32 = arith.constant 0 : i32
    %c0_i32_0 = arith.constant 0 : i32
    %c0_i32_1 = arith.constant 0 : i32
    return %c0_i32, %c0_i32_0 : i32, i32
  }
  func.func @transform_6(%arg0: i32) -> (i32, i32) {
    %c0_i32 = arith.constant 0 : i32
    %c0_i32_0 = arith.constant 0 : i32
    %c0_i32_1 = arith.constant 0 : i32
    return %c0_i32, %c0_i32_0 : i32, i32
  }
  func.func @transform_7(%arg0: i32) -> (i32, i32) {
    %c0_i32 = arith.constant 0 : i32
    %c0_i32_0 = arith.constant 0 : i32
    %c0_i32_1 = arith.constant 0 : i32
    return %c0_i32, %c0_i32_0 : i32, i32
  }
  func.func @transform_8(%arg0: i32) -> (i32, i32, i32) {
    %c0_i32 = arith.constant 0 : i32
    %c0_i32_0 = arith.constant 0 : i32
    %c0_i32_1 = arith.constant 0 : i32
    return %arg0, %c0_i32, %c0_i32_0 : i32, i32, i32
  }
}

</mosaic_0001>

<llo_original>
// kernel: gat_forward.1
$region0: #{gat_forward.1}
  #allocation0 [shape = 'u32[]', space=smem, size = 0x4, offset = 0x4, fixed_abs, tag = 'smem constant byte address 0x4 - core index']
  #allocation1 [shape = 'u32[144,128]{1,0:T(1,128)}', space=vmem, size = 0x12000, scoped, tag = 'internal scratch']
  #allocation2 [shape = 'f32[1,1]{1,0:T(1,128)S(1)}', space=vmem, size = 0x200, scoped, tag = 'scoped memory for gat_forward.1']
  %s0 = inlined_call_operand.vmem [shape: bf16[2,128,151], index: 0, kind: input, shape index: {}]
  %s1 = inlined_call_operand.vmem [shape: f32[2,128,128], index: 1, kind: input, shape index: {}]
  %s2 = inlined_call_operand.vmem [shape: bf16[151,128], index: 2, kind: input, shape index: {}]
  %s3 = inlined_call_operand.vmem [shape: f32[1,128], index: 3, kind: input, shape index: {}]
  %s4 = inlined_call_operand.vmem [shape: f32[1,128], index: 4, kind: input, shape index: {}]
  %s5 = inlined_call_operand.vmem [shape: f32[1,128], index: 5, kind: input, shape index: {}]
  %s6 = inlined_call_operand.vmem [shape: f32[128,128], index: 6, kind: input, shape index: {}]
  %s7 = inlined_call_operand.<no memory space> [shape: f32[1,1], index: 7, kind: input, shape index: {}]
  %s8 = inlined_call_operand.vmem [shape: f32[2,1,128], index: 8, kind: output, shape index: {}]
  %s9 = sld [smem:[#allocation0]]
  $region65: #{gat_forward.1} parent=0
    _
  %s11 = ssub.s32 1, %s9
  %s12 = scalar_select 0, %s11, %s9
  %v13 = vstv %s7
  %14 = vst [vmem:[#allocation2] sm:$0x1] %v13
  loop: start=0, step=1, limit=4
  $region2: #{gat_forward.1} parent=0 // loop_pre_header
    _
  $region3: #{gat_forward.1} parent=0 // loop_header
    %s16 = sphi 0, %s20
    %p17 = scmp.ge.s32.totalorder %s16, 4
    %s26 = sphi 0, %s28
    %s29 = sphi 0, %s26
    %s30 = sphi 0, %s29
    %s46 = sphi 0, %s30
    %s52 = sphi 0, %s54
    %s55 = sphi 0, %s52
    %s56 = sphi 0, %s55
    %s72 = sphi 0, %s56
    %s76 = sphi 0, %s76
    %s78 = sphi 0, %s76
    %s79 = sphi 0, %s78
    %s93 = sphi 0, %s79
    %s97 = sphi 0, %s97
    %s99 = sphi 0, %s97
    %s100 = sphi 0, %s99
    %s114 = sphi 0, %s100
    %s118 = sphi 0, %s118
    %s120 = sphi 0, %s118
    %s121 = sphi 0, %s120
    %s135 = sphi 0, %s121
    %s139 = sphi 0, %s139
    %s141 = sphi 0, %s139
    %s142 = sphi 0, %s141
    %s156 = sphi 0, %s142
    %s160 = sphi 0, %s160
    %s162 = sphi 0, %s160
    %s163 = sphi 0, %s162
    %s177 = sphi 0, %s163
    %s181 = sphi 0, %s181
    %s183 = sphi 0, %s181
    %s184 = sphi 0, %s183
    %s198 = sphi 0, %s184
    %s204 = sphi 0, %s206
    %s207 = sphi 0, %s204
    %s208 = sphi 0, %s207
    %s224 = sphi 0, %s208
  $region4: #{gat_forward.1} parent=0 // loop_header_branch
    %19 = sbr.rel (%p17) target = $region8
  $region5: #{gat_forward.1} parent=0 // loop_body
    %s21 = ssub.s32 %s16, 1
    %s22 = ssub.s32 %s16, 2
    %s23 = sadd.s32 %s16, 1
    %s24 = ssub.s32 %s16, %s23
    %p25 = scmp.eq.s32.totalorder %s24, 0
    %s27 = sadd.s32 %s26, 1
    %s28 = scalar_select %p25, %s26, %s27
    %p31 = pneg %p25
    %p32 = scmp.eq.s32.totalorder %s16, 1
    %p33 = por %p31, %p32
    %p34 = scmp.ne.s32.totalorder %s26, %s29
    %p35 = scmp.eq.s32.totalorder %s16, 0
    %p36 = por %p34, %p35
    %p37 = scmp.ne.s32.totalorder %s26, %s29
    %p38 = scmp.eq.s32.totalorder %s21, 1
    %p39 = por %p37, %p38
    %p40 = scmp.ne.s32.totalorder %s29, %s30
    %p41 = scmp.eq.s32.totalorder %s21, 0
    %p42 = por %p40, %p41
    %p43 = scmp.ne.s32.totalorder %s29, %s30
    %p44 = scmp.eq.s32.totalorder %s22, 1
    %p45 = por %p43, %p44
    %p47 = scmp.ne.s32.totalorder %s30, %s46
    %p48 = scmp.eq.s32.totalorder %s22, 0
    %p49 = por %p47, %p48
    %s50 = ssub.s32 %s16, %s23
    %p51 = scmp.eq.s32.totalorder %s50, 0
    %s53 = sadd.s32 %s52, 1
    %s54 = scalar_select %p51, %s52, %s53
    %p57 = pneg %p51
    %p58 = scmp.eq.s32.totalorder %s16, 1
    %p59 = por %p57, %p58
    %p60 = scmp.ne.s32.totalorder %s52, %s55
    %p61 = scmp.eq.s32.totalorder %s16, 0
    %p62 = por %p60, %p61
    %p63 = scmp.ne.s32.totalorder %s52, %s55
    %p64 = scmp.eq.s32.totalorder %s21, 1
    %p65 = por %p63, %p64
    %p66 = scmp.ne.s32.totalorder %s55, %s56
    %p67 = scmp.eq.s32.totalorder %s21, 0
    %p68 = por %p66, %p67
    %p69 = scmp.ne.s32.totalorder %s55, %s56
    %p70 = scmp.eq.s32.totalorder %s22, 1
    %p71 = por %p69, %p70
    %p73 = scmp.ne.s32.totalorder %s56, %s72
    %p74 = scmp.eq.s32.totalorder %s22, 0
    %p75 = por %p73, %p74
    %s77 = sadd.s32 %s76, 1
    %p80 = scmp.eq.s32.totalorder %s16, 1
    %p81 = scmp.ne.s32.totalorder %s76, %s78
    %p82 = scmp.eq.s32.totalorder %s16, 0
    %p83 = por %p81, %p82
    %p84 = scmp.ne.s32.totalorder %s76, %s78
    %p85 = scmp.eq.s32.totalorder %s21, 1
    %p86 = por %p84, %p85
    %p87 = scmp.ne.s32.totalorder %s78, %s79
    %p88 = scmp.eq.s32.totalorder %s21, 0
    %p89 = por %p87, %p88
    %p90 = scmp.ne.s32.totalorder %s78, %s79
    %p91 = scmp.eq.s32.totalorder %s22, 1
    %p92 = por %p90, %p91
    %p94 = scmp.ne.s32.totalorder %s79, %s93
    %p95 = scmp.eq.s32.totalorder %s22, 0
    %p96 = por %p94, %p95
    %s98 = sadd.s32 %s97, 1
    %p101 = scmp.eq.s32.totalorder %s16, 1
    %p102 = scmp.ne.s32.totalorder %s97, %s99
    %p103 = scmp.eq.s32.totalorder %s16, 0
    %p104 = por %p102, %p103
    %p105 = scmp.ne.s32.totalorder %s97, %s99
    %p106 = scmp.eq.s32.totalorder %s21, 1
    %p107 = por %p105, %p106
    %p108 = scmp.ne.s32.totalorder %s99, %s100
    %p109 = scmp.eq.s32.totalorder %s21, 0
    %p110 = por %p108, %p109
    %p111 = scmp.ne.s32.totalorder %s99, %s100
    %p112 = scmp.eq.s32.totalorder %s22, 1
    %p113 = por %p111, %p112
    %p115 = scmp.ne.s32.totalorder %s100, %s114
    %p116 = scmp.eq.s32.totalorder %s22, 0
    %p117 = por %p115, %p116
    %s119 = sadd.s32 %s118, 1
    %p122 = scmp.eq.s32.totalorder %s16, 1
    %p123 = scmp.ne.s32.totalorder %s118, %s120
    %p124 = scmp.eq.s32.totalorder %s16, 0
    %p125 = por %p123, %p124
    %p126 = scmp.ne.s32.totalorder %s118, %s120
    %p127 = scmp.eq.s32.totalorder %s21, 1
    %p128 = por %p126, %p127
    %p129 = scmp.ne.s32.totalorder %s120, %s121
    %p130 = scmp.eq.s32.totalorder %s21, 0
    %p131 = por %p129, %p130
    %p132 = scmp.ne.s32.totalorder %s120, %s121
    %p133 = scmp.eq.s32.totalorder %s22, 1
    %p134 = por %p132, %p133
    %p136 = scmp.ne.s32.totalorder %s121, %s135
    %p137 = scmp.eq.s32.totalorder %s22, 0
    %p138 = por %p136, %p137
    %s140 = sadd.s32 %s139, 1
    %p143 = scmp.eq.s32.totalorder %s16, 1
    %p144 = scmp.ne.s32.totalorder %s139, %s141
    %p145 = scmp.eq.s32.totalorder %s16, 0
    %p146 = por %p144, %p145
    %p147 = scmp.ne.s32.totalorder %s139, %s141
    %p148 = scmp.eq.s32.totalorder %s21, 1
    %p149 = por %p147, %p148
    %p150 = scmp.ne.s32.totalorder %s141, %s142
    %p151 = scmp.eq.s32.totalorder %s21, 0
    %p152 = por %p150, %p151
    %p153 = scmp.ne.s32.totalorder %s141, %s142
    %p154 = scmp.eq.s32.totalorder %s22, 1
    %p155 = por %p153, %p154
    %p157 = scmp.ne.s32.totalorder %s142, %s156
    %p158 = scmp.eq.s32.totalorder %s22, 0
    %p159 = por %p157, %p158
    %s161 = sadd.s32 %s160, 1
    %p164 = scmp.eq.s32.totalorder %s16, 1
    %p165 = scmp.ne.s32.totalorder %s160, %s162
    %p166 = scmp.eq.s32.totalorder %s16, 0
    %p167 = por %p165, %p166
    %p168 = scmp.ne.s32.totalorder %s160, %s162
    %p169 = scmp.eq.s32.totalorder %s21, 1
    %p170 = por %p168, %p169
    %p171 = scmp.ne.s32.totalorder %s162, %s163
    %p172 = scmp.eq.s32.totalorder %s21, 0
    %p173 = por %p171, %p172
    %p174 = scmp.ne.s32.totalorder %s162, %s163
    %p175 = scmp.eq.s32.totalorder %s22, 1
    %p176 = por %p174, %p175
    %p178 = scmp.ne.s32.totalorder %s163, %s177
    %p179 = scmp.eq.s32.totalorder %s22, 0
    %p180 = por %p178, %p179
    %s182 = sadd.s32 %s181, 1
    %p185 = scmp.eq.s32.totalorder %s16, 1
    %p186 = scmp.ne.s32.totalorder %s181, %s183
    %p187 = scmp.eq.s32.totalorder %s16, 0
    %p188 = por %p186, %p187
    %p189 = scmp.ne.s32.totalorder %s181, %s183
    %p190 = scmp.eq.s32.totalorder %s21, 1
    %p191 = por %p189, %p190
    %p192 = scmp.ne.s32.totalorder %s183, %s184
    %p193 = scmp.eq.s32.totalorder %s21, 0
    %p194 = por %p192, %p193
    %p195 = scmp.ne.s32.totalorder %s183, %s184
    %p196 = scmp.eq.s32.totalorder %s22, 1
    %p197 = por %p195, %p196
    %p199 = scmp.ne.s32.totalorder %s184, %s198
    %p200 = scmp.eq.s32.totalorder %s22, 0
    %p201 = por %p199, %p200
    %s202 = ssub.s32 %s16, %s23
    %p203 = scmp.eq.s32.totalorder %s202, 0
    %s205 = sadd.s32 %s204, 1
    %s206 = scalar_select %p203, %s204, %s205
    %p209 = pneg %p203
    %p210 = scmp.eq.s32.totalorder %s16, 1
    %p211 = por %p209, %p210
    %p212 = scmp.ne.s32.totalorder %s204, %s207
    %p213 = scmp.eq.s32.totalorder %s16, 0
    %p214 = por %p212, %p213
    %p215 = scmp.ne.s32.totalorder %s204, %s207
    %p216 = scmp.eq.s32.totalorder %s21, 1
    %p217 = por %p215, %p216
    %p218 = scmp.ne.s32.totalorder %s207, %s208
    %p219 = scmp.eq.s32.totalorder %s21, 0
    %p220 = por %p218, %p219
    %p221 = scmp.ne.s32.totalorder %s207, %s208
    %p222 = scmp.eq.s32.totalorder %s22, 1
    %p223 = por %p221, %p222
    %p225 = scmp.ne.s32.totalorder %s208, %s224
    %p226 = scmp.eq.s32.totalorder %s22, 0
    %p227 = por %p225, %p226
    %p228 = scmp.le.s32.totalorder 1, %s16
    %p229 = scmp.lt.s32.totalorder %s16, 3
    %p230 = pnand %p228, %p229
    %p231 = pneg %p230
    // Predicated region
    $region9: #{gat_forward.1} parent=5 // pred_check
      _
    $region10: #{gat_forward.1} parent=5 // pred_check_branch
      %233 = sbr.rel (%p230) target = $region12
    $region11: #{gat_forward.1} parent=5 // pred_region
      %s234 = ssub.s32 %s16, 1
      // Predicated region
      $region13: #{gat_forward.1} parent=11 // pred_check
        %p235 = pneg %p89
      $region14: #{gat_forward.1} parent=11 // pred_check_branch
        %237 = sbr.rel (%p235) target = $region16
      $region15: #{gat_forward.1} parent=11 // pred_region
        _
      $region16: #{gat_forward.1} parent=11 // pred_fallthru
        _
      // Predicated region
      $region17: #{gat_forward.1} parent=11 // pred_check
        %p238 = pneg %p110
      $region18: #{gat_forward.1} parent=11 // pred_check_branch
        %240 = sbr.rel (%p238) target = $region20
      $region19: #{gat_forward.1} parent=11 // pred_region
        _
      $region20: #{gat_forward.1} parent=11 // pred_fallthru
        _
      // Predicated region
      $region21: #{gat_forward.1} parent=11 // pred_check
        %p241 = pneg %p131
      $region22: #{gat_forward.1} parent=11 // pred_check_branch
        %243 = sbr.rel (%p241) target = $region24
      $region23: #{gat_forward.1} parent=11 // pred_region
        _
      $region24: #{gat_forward.1} parent=11 // pred_fallthru
        _
      // Predicated region
      $region25: #{gat_forward.1} parent=11 // pred_check
        %p244 = pneg %p152
      $region26: #{gat_forward.1} parent=11 // pred_check_branch
        %246 = sbr.rel (%p244) target = $region28
      $region27: #{gat_forward.1} parent=11 // pred_region
        _
      $region28: #{gat_forward.1} parent=11 // pred_fallthru
        _
      // Predicated region
      $region29: #{gat_forward.1} parent=11 // pred_check
        %p247 = pneg %p173
      $region30: #{gat_forward.1} parent=11 // pred_check_branch
        %249 = sbr.rel (%p247) target = $region32
      $region31: #{gat_forward.1} parent=11 // pred_region
        _
      $region32: #{gat_forward.1} parent=11 // pred_fallthru
        _
      // Predicated region
      $region33: #{gat_forward.1} parent=11 // pred_check
        %p250 = pneg %p194
      $region34: #{gat_forward.1} parent=11 // pred_check_branch
        %252 = sbr.rel (%p250) target = $region36
      $region35: #{gat_forward.1} parent=11 // pred_region
        _
      $region36: #{gat_forward.1} parent=11 // pred_fallthru
        _
    $region12: #{gat_forward.1} parent=5 // pred_fallthru
      _
    %p253 = scmp.lt.s32.totalorder %s16, 2
    // Predicated region
    $region37: #{gat_forward.1} parent=5 // pred_check
      %p254 = pneg %p253
    $region38: #{gat_forward.1} parent=5 // pred_check_branch
      %256 = sbr.rel (%p254) target = $region40
    $region39: #{gat_forward.1} parent=5 // pred_region
      // Predicated region
      $region41: #{gat_forward.1} parent=39 // pred_check
        %p257 = pneg %p36
      $region42: #{gat_forward.1} parent=39 // pred_check_branch
        %259 = sbr.rel (%p257) target = $region44
      $region43: #{gat_forward.1} parent=39 // pred_region
        %p260 = scmp.lt.s32.totalorder %s16, 1
        %s261 = scalar_select %p260, %s16, 1
        %s262 = smul.addr %s261, 32
        %s263 = smul.addr %s262, 4
        %s264 = scalar_lea.vmem %s0, %s263
      $region44: #{gat_forward.1} parent=39 // pred_fallthru
        _
      // Predicated region
      $region45: #{gat_forward.1} parent=39 // pred_check
        %p265 = pneg %p62
      $region46: #{gat_forward.1} parent=39 // pred_check_branch
        %267 = sbr.rel (%p265) target = $region48
      $region47: #{gat_forward.1} parent=39 // pred_region
        %p268 = scmp.lt.s32.totalorder %s16, 1
        %s269 = scalar_select %p268, %s16, 1
        %s270 = smul.addr %s269, 16
        %s271 = smul.addr %s270, 8
        %s272 = scalar_lea.vmem %s1, %s271
      $region48: #{gat_forward.1} parent=39 // pred_fallthru
        _
    $region40: #{gat_forward.1} parent=5 // pred_fallthru
      _
    %p273 = scmp.le.s32.totalorder 1, %s16
    %p274 = scmp.lt.s32.totalorder %s16, 3
    %p275 = pnand %p273, %p274
    %p276 = pneg %p275
    // Predicated region
    $region49: #{gat_forward.1} parent=5 // pred_check
      _
    $region50: #{gat_forward.1} parent=5 // pred_check_branch
      %278 = sbr.rel (%p275) target = $region52
    $region51: #{gat_forward.1} parent=5 // pred_region
      %s279 = ssub.s32 %s16, 1
      %p280 = scmp.lt.s32.totalorder %s21, 1
      %s281 = scalar_select %p280, %s21, 1
      %s282 = smul.addr %s281, 32
      %s283 = smul.addr %s282, 4
      %s284 = scalar_lea.vmem %s0, %s283
      %p285 = pneg %p42
      %p286 = pneg %p39
      %p287 = scmp.lt.s32.totalorder %s21, 1
      %s288 = scalar_select %p287, %s21, 1
      %s289 = smul.addr %s288, 16
      %s290 = smul.addr %s289, 8
      %s291 = scalar_lea.vmem %s1, %s290
      %p292 = pneg %p68
      %p293 = pneg %p65
      %p294 = pneg %p89
      %p295 = pneg %p86
      %p296 = pneg %p110
      %p297 = pneg %p107
      %p298 = pneg %p131
      %p299 = pneg %p128
      %p300 = pneg %p152
      %p301 = pneg %p149
      %p302 = pneg %p173
      %p303 = pneg %p170
      %p304 = pneg %p194
      %p305 = pneg %p191
      %p306 = pneg %p220
      %p307 = pneg %p217
      %p308 = scmp.lt.s32.totalorder %s21, 1
      %s309 = scalar_select %p308, %s21, 1
      %s310 = scalar_lea.vmem %s8, %s309
      %p311 = scmp.lt.s32.totalorder %s21, 1
      %s312 = scalar_select %p311, %s21, 1
      %s313 = smul.addr %s312, 32
      %s314 = smul.addr %s313, 4
      %s315 = scalar_lea.vmem %s0, %s314
      %p316 = scmp.lt.s32.totalorder %s21, 1
      %s317 = scalar_select %p316, %s21, 1
      %s318 = smul.addr %s317, 16
      %s319 = smul.addr %s318, 8
      %s320 = scalar_lea.vmem %s1, %s319
      %p321 = scmp.lt.s32.totalorder %s21, 1
      %s322 = scalar_select %p321, %s21, 1
      %s323 = scalar_lea.vmem %s8, %s322
      %v325 = vld [vmem:[%s315] sm:$0xff]
      %v326 = vld [vmem:[%s315 + $0x8] sm:$0xff]
      %v327 = vld [vmem:[%s315 + $0x10] sm:$0xff]
      %v328 = vld [vmem:[%s315 + $0x18] sm:$0xff]
      %v329 = vld [vmem:[%s315 + $0x20] sm:$0xff]
      %v330 = vld [vmem:[%s315 + $0x28] sm:$0xff]
      %v331 = vld [vmem:[%s315 + $0x30] sm:$0xff]
      %v332 = vld [vmem:[%s315 + $0x38] sm:$0xff]
      %v333 = vld [vmem:[%s315 + $0x40] sm:$0xff]
      %v334 = vld [vmem:[%s315 + $0x48] sm:$0xff]
      %v335 = vld [vmem:[%s315 + $0x50] sm:$0xff]
      %v336 = vld [vmem:[%s315 + $0x58] sm:$0xff]
      %v337 = vld [vmem:[%s315 + $0x60] sm:$0xff]
      %v338 = vld [vmem:[%s315 + $0x68] sm:$0xff]
      %v339 = vld [vmem:[%s315 + $0x70] sm:$0xff]
      %v340 = vld [vmem:[%s315 + $0x78] sm:$0xff]
      %v341 = vld [vmem:[%s2] sm:$0xf]
      %v342 = vld [vmem:[%s2 + $0x4] sm:$0xf]
      %v343 = vld [vmem:[%s2 + $0x8] sm:$0xf]
      %v344 = vld [vmem:[%s2 + $0xc] sm:$0xf]
      %v345 = vld [vmem:[%s2 + $0x10] sm:$0xf]
      %v346 = vld [vmem:[%s2 + $0x14] sm:$0xf]
      %v347 = vld [vmem:[%s2 + $0x18] sm:$0xf]
      %v348 = vld [vmem:[%s2 + $0x1c] sm:$0xf]
      %v349 = vld [vmem:[%s2 + $0x20] sm:$0xf]
      %v350 = vld [vmem:[%s2 + $0x24] sm:$0xf]
      %v351 = vld [vmem:[%s2 + $0x28] sm:$0xf]
      %v352 = vld [vmem:[%s2 + $0x2c] sm:$0xf]
      %v353 = vld [vmem:[%s2 + $0x30] sm:$0xf]
      %v354 = vld [vmem:[%s2 + $0x34] sm:$0xf]
      %v355 = vld [vmem:[%s2 + $0x38] sm:$0xf]
      %v356 = vld [vmem:[%s2 + $0x3c] sm:$0xf]
      %v357 = vld [vmem:[%s2 + $0x40] sm:$0xf]
      %v358 = vld [vmem:[%s2 + $0x44] sm:$0xf]
      %v359 = vld [vmem:[%s2 + $0x48] sm:$0xf]
      %v376 = vunpack.c.l.b16 %v325
      %v377 = vunpack.c.h.b16 %v325
      %v378 = vunpack.c.l.b16 %v326
      %v379 = vunpack.c.h.b16 %v326
      %v380 = vunpack.c.l.b16 %v327
      %v381 = vunpack.c.h.b16 %v327
      %v382 = vunpack.c.l.b16 %v328
      %v383 = vunpack.c.h.b16 %v328
      %v384 = vunpack.c.l.b16 %v329
      %v385 = vunpack.c.h.b16 %v329
      %v386 = vunpack.c.l.b16 %v330
      %v387 = vunpack.c.h.b16 %v330
      %v388 = vunpack.c.l.b16 %v331
      %v389 = vunpack.c.h.b16 %v331
      %v390 = vunpack.c.l.b16 %v332
      %v391 = vunpack.c.h.b16 %v332
      %v392 = vunpack.c.l.b16 %v333
      %v393 = vunpack.c.h.b16 %v333
      %v394 = vunpack.c.l.b16 %v334
      %v395 = vunpack.c.h.b16 %v334
      %v396 = vunpack.c.l.b16 %v335
      %v397 = vunpack.c.h.b16 %v335
      %v398 = vunpack.c.l.b16 %v336
      %v399 = vunpack.c.h.b16 %v336
      %v400 = vunpack.c.l.b16 %v337
      %v401 = vunpack.c.h.b16 %v337
      %v402 = vunpack.c.l.b16 %v338
      %v403 = vunpack.c.h.b16 %v338
      %v404 = vunpack.c.l.b16 %v339
      %v405 = vunpack.c.h.b16 %v339
      %v406 = vunpack.c.l.b16 %v340
      %v407 = vunpack.c.h.b16 %v340
      %v408 = vpack.c.b16 %v378, %v376
      %v409 = vpack.c.b16 %v379, %v377
      %v410 = vpack.c.b16 %v382, %v380
      %v411 = vpack.c.b16 %v383, %v381
      %v412 = vpack.c.b16 %v386, %v384
      %v413 = vpack.c.b16 %v387, %v385
      %v414 = vpack.c.b16 %v390, %v388
      %v415 = vpack.c.b16 %v391, %v389
      %v416 = vpack.c.b16 %v394, %v392
      %v417 = vpack.c.b16 %v395, %v393
      %v418 = vpack.c.b16 %v398, %v396
      %v419 = vpack.c.b16 %v399, %v397
      %v420 = vpack.c.b16 %v402, %v400
      %v421 = vpack.c.b16 %v403, %v401
      %v422 = vpack.c.b16 %v406, %v404
      %v423 = vpack.c.b16 %v407, %v405
      %v451 = vunpack.c.l.b16 %v341
      %v452 = vunpack.c.l.b16 %v342
      %v453 = vunpack.c.l.b16 %v343
      %v454 = vunpack.c.l.b16 %v344
      %v455 = vunpack.c.l.b16 %v345
      %v456 = vunpack.c.l.b16 %v346
      %v457 = vunpack.c.l.b16 %v347
      %v458 = vunpack.c.l.b16 %v348
      %v459 = vunpack.c.l.b16 %v349
      %v460 = vunpack.c.l.b16 %v350
      %v461 = vunpack.c.l.b16 %v351
      %v462 = vunpack.c.l.b16 %v352
      %v463 = vunpack.c.l.b16 %v353
      %v464 = vunpack.c.l.b16 %v354
      %v465 = vunpack.c.l.b16 %v355
      %v466 = vunpack.c.l.b16 %v356
      %v467 = vunpack.c.l.b16 %v357
      %v468 = vunpack.c.l.b16 %v358
      %v469 = vunpack.c.l.b16 %v359
      %v470 = vpack.c.b16 %v452, %v451
      %v471 = vpack.c.b16 %v454, %v453
      %v472 = vpack.c.b16 %v456, %v455
      %v473 = vpack.c.b16 %v458, %v457
      %v474 = vpack.c.b16 %v460, %v459
      %v475 = vpack.c.b16 %v462, %v461
      %v476 = vpack.c.b16 %v464, %v463
      %v477 = vpack.c.b16 %v466, %v465
      %v478 = vpack.c.b16 %v468, %v467
      %v479 = vpack.c.b16 %v469, %v469
      %vm489 = vcmask 187392
      %v491 = vsel %vm489, %v409, 0
      %v494 = vsel %vm489, %v411, 0
      %v497 = vsel %vm489, %v413, 0
      %v500 = vsel %vm489, %v415, 0
      %v503 = vsel %vm489, %v417, 0
      %v506 = vsel %vm489, %v419, 0
      %v509 = vsel %vm489, %v421, 0
      %v512 = vsel %vm489, %v423, 0
      %vm514 = vcmask 1042432
      %vm515 = vcmask 1043456
      %v516 = vsel %vm514, 4294967295, 65535
      %v517 = vsel %vm515, %v516, 0
      %v519 = vand.u32 %v479, %v517
      %521 = vmatprep.subr.bf16.mxu0 0
      %522 = vmatpush1.bf16.msra.mxu0 %v477
      %523 = vmatprep.subr.bf16.mxu0 0
      %524 = vmatpush1.bf16.msra.mxu0 %v476
      %525 = vmatprep.subr.bf16.mxu0 0
      %526 = vmatpush1.bf16.msra.mxu0 %v475
      %527 = vmatprep.subr.bf16.mxu0 0
      %528 = vmatpush1.bf16.msra.mxu0 %v474
      %529 = vmatprep.subr.bf16.mxu0 0
      %530 = vmatpush1.bf16.msra.mxu0 %v473
      %531 = vmatprep.subr.bf16.mxu0 0
      %532 = vmatpush1.bf16.msra.mxu0 %v472
      %533 = vmatprep.subr.bf16.mxu0 0
      %534 = vmatpush1.bf16.msra.mxu0 %v471
      %535 = vmatprep.subr.bf16.mxu0 0
      %536 = vmatpush1.bf16.msra.mxu0 %v470
      %537 = vmatprep.subr.bf16.mxu0 0
      %538 = vmatpush2.bf16.msra.mxu0 0
      %539 = vmatprep.subr.bf16.mxu0 0
      %540 = vmatpush2.bf16.msra.mxu0 0
      %541 = vmatprep.subr.bf16.mxu0 0
      %542 = vmatpush2.bf16.msra.mxu0 0
      %543 = vmatprep.subr.bf16.mxu0 0
      %544 = vmatpush2.bf16.msra.mxu0 0
      %545 = vmatprep.subr.bf16.mxu0 0
      %546 = vmatpush2.bf16.msra.mxu0 0
      %547 = vmatprep.subr.bf16.mxu0 0
      %548 = vmatpush2.bf16.msra.mxu0 0
      %549 = vmatprep.subr.bf16.mxu0 0
      %550 = vmatpush2.bf16.msra.mxu0 %v519
      %551 = vmatprep.subr.bf16.mxu0 0
      %552 = vmatpush2.bf16.msra.mxu0 %v478
      %553 = vmatprep.mubr.bf16.mxu0 %v491
      %554 = vmatmul.mubr.bf16.gmra.mxu0 %v408
      %v555 = vpop.f32.mrf.mxu0
      %v556 = vadd.f32 0.0, %v555
      %v557 = vpop.f32.mrf.mxu0
      %v558 = vpop.f32.mrf.mxu0
      %v559 = vadd.f32 0.0, %v558
      %v560 = vpop.f32.mrf.mxu0
      %561 = vmatprep.mubr.bf16.mxu0 %v494
      %562 = vmatmul.mubr.bf16.gmra.mxu0 %v410
      %v563 = vpop.f32.mrf.mxu0
      %v564 = vadd.f32 0.0, %v563
      %v565 = vpop.f32.mrf.mxu0
      %v566 = vpop.f32.mrf.mxu0
      %v567 = vadd.f32 0.0, %v566
      %v568 = vpop.f32.mrf.mxu0
      %569 = vmatprep.mubr.bf16.mxu0 %v497
      %570 = vmatmul.mubr.bf16.gmra.mxu0 %v412
      %v571 = vpop.f32.mrf.mxu0
      %v572 = vadd.f32 0.0, %v571
      %v573 = vpop.f32.mrf.mxu0
      %v574 = vpop.f32.mrf.mxu0
      %v575 = vadd.f32 0.0, %v574
      %v576 = vpop.f32.mrf.mxu0
      %577 = vmatprep.mubr.bf16.mxu0 %v500
      %578 = vmatmul.mubr.bf16.gmra.mxu0 %v414
      %v579 = vpop.f32.mrf.mxu0
      %v580 = vadd.f32 0.0, %v579
      %v581 = vpop.f32.mrf.mxu0
      %v582 = vpop.f32.mrf.mxu0
      %v583 = vadd.f32 0.0, %v582
      %v584 = vpop.f32.mrf.mxu0
      %585 = vmatprep.mubr.bf16.mxu0 %v503
      %586 = vmatmul.mubr.bf16.gmra.mxu0 %v416
      %v587 = vpop.f32.mrf.mxu0
      %v588 = vadd.f32 0.0, %v587
      %v589 = vpop.f32.mrf.mxu0
      %v590 = vpop.f32.mrf.mxu0
      %v591 = vadd.f32 0.0, %v590
      %v592 = vpop.f32.mrf.mxu0
      %593 = vmatprep.mubr.bf16.mxu0 %v506
      %594 = vmatmul.mubr.bf16.gmra.mxu0 %v418
      %v595 = vpop.f32.mrf.mxu0
      %v596 = vadd.f32 0.0, %v595
      %v597 = vpop.f32.mrf.mxu0
      %v598 = vpop.f32.mrf.mxu0
      %v599 = vadd.f32 0.0, %v598
      %v600 = vpop.f32.mrf.mxu0
      %601 = vmatprep.mubr.bf16.mxu0 %v509
      %602 = vmatmul.mubr.bf16.gmra.mxu0 %v420
      %v603 = vpop.f32.mrf.mxu0
      %v604 = vadd.f32 0.0, %v603
      %v605 = vpop.f32.mrf.mxu0
      %v606 = vpop.f32.mrf.mxu0
      %v607 = vadd.f32 0.0, %v606
      %v608 = vpop.f32.mrf.mxu0
      %609 = vmatprep.mubr.bf16.mxu0 %v512
      %610 = vmatmul.mubr.bf16.gmra.mxu0 %v422
      %v611 = vpop.f32.mrf.mxu0
      %v612 = vadd.f32 0.0, %v611
      %v613 = vpop.f32.mrf.mxu0
      %v614 = vpop.f32.mrf.mxu0
      %v615 = vadd.f32 0.0, %v614
      %v616 = vpop.f32.mrf.mxu0
      %617 = vdwg.mxu0
      %v618 = vld [vmem:[%s3] sm:$0x1]
      %v620 = vlaneseq
      %v621 = vshrl.u32 %v620, 7
      %v622 = vsub.s32 0, %v621
      %v623 = vrot.slane %v618, %v622
      %v625 = vmul.f32 %v556, %v623
      %v626 = vmul.f32 %v559, %v623
      %v627 = vmul.f32 %v564, %v623
      %v628 = vmul.f32 %v567, %v623
      %v629 = vmul.f32 %v572, %v623
      %v630 = vmul.f32 %v575, %v623
      %v631 = vmul.f32 %v580, %v623
      %v632 = vmul.f32 %v583, %v623
      %v633 = vmul.f32 %v588, %v623
      %v634 = vmul.f32 %v591, %v623
      %v635 = vmul.f32 %v596, %v623
      %v636 = vmul.f32 %v599, %v623
      %v637 = vmul.f32 %v604, %v623
      %v638 = vmul.f32 %v607, %v623
      %v639 = vmul.f32 %v612, %v623
      %v640 = vmul.f32 %v615, %v623
      %641 = vadd.xlane.f32.xlu0 %v625
      %v642 = vpop.xlane.xlu0 %641
      %643 = vadd.xlane.f32.xlu0 %v626
      %v644 = vpop.xlane.xlu0 %643
      %645 = vadd.xlane.f32.xlu0 %v627
      %v646 = vpop.xlane.xlu0 %645
      %647 = vadd.xlane.f32.xlu0 %v628
      %v648 = vpop.xlane.xlu0 %647
      %649 = vadd.xlane.f32.xlu0 %v629
      %v650 = vpop.xlane.xlu0 %649
      %651 = vadd.xlane.f32.xlu0 %v630
      %v652 = vpop.xlane.xlu0 %651
      %653 = vadd.xlane.f32.xlu0 %v631
      %v654 = vpop.xlane.xlu0 %653
      %655 = vadd.xlane.f32.xlu0 %v632
      %v656 = vpop.xlane.xlu0 %655
      %657 = vadd.xlane.f32.xlu0 %v633
      %v658 = vpop.xlane.xlu0 %657
      %659 = vadd.xlane.f32.xlu0 %v634
      %v660 = vpop.xlane.xlu0 %659
      %661 = vadd.xlane.f32.xlu0 %v635
      %v662 = vpop.xlane.xlu0 %661
      %663 = vadd.xlane.f32.xlu0 %v636
      %v664 = vpop.xlane.xlu0 %663
      %665 = vadd.xlane.f32.xlu0 %v637
      %v666 = vpop.xlane.xlu0 %665
      %667 = vadd.xlane.f32.xlu0 %v638
      %v668 = vpop.xlane.xlu0 %667
      %669 = vadd.xlane.f32.xlu0 %v639
      %v670 = vpop.xlane.xlu0 %669
      %671 = vadd.xlane.f32.xlu0 %v640
      %v672 = vpop.xlane.xlu0 %671
      %v673 = vld [vmem:[%s4] sm:$0x1]
      %v675 = vlaneseq
      %v676 = vshrl.u32 %v675, 7
      %v677 = vsub.s32 0, %v676
      %v678 = vrot.slane %v673, %v677
      %v680 = vmul.f32 %v556, %v678
      %v681 = vmul.f32 %v559, %v678
      %v682 = vmul.f32 %v564, %v678
      %v683 = vmul.f32 %v567, %v678
      %v684 = vmul.f32 %v572, %v678
      %v685 = vmul.f32 %v575, %v678
      %v686 = vmul.f32 %v580, %v678
      %v687 = vmul.f32 %v583, %v678
      %v688 = vmul.f32 %v588, %v678
      %v689 = vmul.f32 %v591, %v678
      %v690 = vmul.f32 %v596, %v678
      %v691 = vmul.f32 %v599, %v678
      %v692 = vmul.f32 %v604, %v678
      %v693 = vmul.f32 %v607, %v678
      %v694 = vmul.f32 %v612, %v678
      %v695 = vmul.f32 %v615, %v678
      %696 = vadd.xlane.f32.xlu0 %v680
      %v697 = vpop.xlane.xlu0 %696
      %698 = vadd.xlane.f32.xlu0 %v681
      %v699 = vpop.xlane.xlu0 %698
      %700 = vadd.xlane.f32.xlu0 %v682
      %v701 = vpop.xlane.xlu0 %700
      %702 = vadd.xlane.f32.xlu0 %v683
      %v703 = vpop.xlane.xlu0 %702
      %704 = vadd.xlane.f32.xlu0 %v684
      %v705 = vpop.xlane.xlu0 %704
      %706 = vadd.xlane.f32.xlu0 %v685
      %v707 = vpop.xlane.xlu0 %706
      %708 = vadd.xlane.f32.xlu0 %v686
      %v709 = vpop.xlane.xlu0 %708
      %710 = vadd.xlane.f32.xlu0 %v687
      %v711 = vpop.xlane.xlu0 %710
      %712 = vadd.xlane.f32.xlu0 %v688
      %v713 = vpop.xlane.xlu0 %712
      %714 = vadd.xlane.f32.xlu0 %v689
      %v715 = vpop.xlane.xlu0 %714
      %716 = vadd.xlane.f32.xlu0 %v690
      %v717 = vpop.xlane.xlu0 %716
      %718 = vadd.xlane.f32.xlu0 %v691
      %v719 = vpop.xlane.xlu0 %718
      %720 = vadd.xlane.f32.xlu0 %v692
      %v721 = vpop.xlane.xlu0 %720
      %722 = vadd.xlane.f32.xlu0 %v693
      %v723 = vpop.xlane.xlu0 %722
      %724 = vadd.xlane.f32.xlu0 %v694
      %v725 = vpop.xlane.xlu0 %724
      %726 = vadd.xlane.f32.xlu0 %v695
      %v727 = vpop.xlane.xlu0 %726
      %728 = vxpose.xlu0.b32.start [1/16] %v642, 128
      %729 = vxpose.xlu0.b32.cont [2/16] %v644, 128
      %730 = vxpose.xlu0.b32.cont [3/16] %v646, 128
      %731 = vxpose.xlu0.b32.cont [4/16] %v648, 128
      %732 = vxpose.xlu0.b32.cont [5/16] %v650, 128
      %733 = vxpose.xlu0.b32.cont [6/16] %v652, 128
      %734 = vxpose.xlu0.b32.cont [7/16] %v654, 128
      %735 = vxpose.xlu0.b32.cont [8/16] %v656, 128
      %736 = vxpose.xlu0.b32.cont [9/16] %v658, 128
      %737 = vxpose.xlu0.b32.cont [10/16] %v660, 128
      %738 = vxpose.xlu0.b32.cont [11/16] %v662, 128
      %739 = vxpose.xlu0.b32.cont [12/16] %v664, 128
      %740 = vxpose.xlu0.b32.cont [13/16] %v666, 128
      %741 = vxpose.xlu0.b32.cont [14/16] %v668, 128
      %742 = vxpose.xlu0.b32.cont [15/16] %v670, 128
      %743 = vxpose.xlu0.b32.end [16/16] %v672, 128
      %v744 = vpop.trf.xlu0
      %v745 = vpop.trf.xlu0
      %v746 = vpop.trf.xlu0
      %v747 = vpop.trf.xlu0
      %v748 = vpop.trf.xlu0
      %v749 = vpop.trf.xlu0
      %v750 = vpop.trf.xlu0
      %v751 = vpop.trf.xlu0
      %v752 = vpop.trf.xlu0
      %v753 = vpop.trf.xlu0
      %v754 = vpop.trf.xlu0
      %v755 = vpop.trf.xlu0
      %v756 = vpop.trf.xlu0
      %v757 = vpop.trf.xlu0
      %v758 = vpop.trf.xlu0
      %v759 = vpop.trf.xlu0
      %v760 = vlaneseq
      %v761 = vshrl.u32 %v760, 7
      %v762 = vsub.s32 0, %v761
      %v763 = vrot.slane %v744, %v762
      %v764 = vadd.f32 %v697, %v763
      %v765 = vadd.f32 %v699, %v763
      %v766 = vadd.f32 %v701, %v763
      %v767 = vadd.f32 %v703, %v763
      %v768 = vadd.f32 %v705, %v763
      %v769 = vadd.f32 %v707, %v763
      %v770 = vadd.f32 %v709, %v763
      %v771 = vadd.f32 %v711, %v763
      %v772 = vadd.f32 %v713, %v763
      %v773 = vadd.f32 %v715, %v763
      %v774 = vadd.f32 %v717, %v763
      %v775 = vadd.f32 %v719, %v763
      %v776 = vadd.f32 %v721, %v763
      %v777 = vadd.f32 %v723, %v763
      %v778 = vadd.f32 %v725, %v763
      %v779 = vadd.f32 %v727, %v763
      %vm780 = vcmp.gt.f32.partialorder %v764, 0.0
      %vm781 = vcmp.gt.f32.partialorder %v765, 0.0
      %vm782 = vcmp.gt.f32.partialorder %v766, 0.0
      %vm783 = vcmp.gt.f32.partialorder %v767, 0.0
      %vm784 = vcmp.gt.f32.partialorder %v768, 0.0
      %vm785 = vcmp.gt.f32.partialorder %v769, 0.0
      %vm786 = vcmp.gt.f32.partialorder %v770, 0.0
      %vm787 = vcmp.gt.f32.partialorder %v771, 0.0
      %vm788 = vcmp.gt.f32.partialorder %v772, 0.0
      %vm789 = vcmp.gt.f32.partialorder %v773, 0.0
      %vm790 = vcmp.gt.f32.partialorder %v774, 0.0
      %vm791 = vcmp.gt.f32.partialorder %v775, 0.0
      %vm792 = vcmp.gt.f32.partialorder %v776, 0.0
      %vm793 = vcmp.gt.f32.partialorder %v777, 0.0
      %vm794 = vcmp.gt.f32.partialorder %v778, 0.0
      %vm795 = vcmp.gt.f32.partialorder %v779, 0.0
      %v796 = vmul.f32 %v764, 0.2
      %v797 = vmul.f32 %v765, 0.2
      %v798 = vmul.f32 %v766, 0.2
      %v799 = vmul.f32 %v767, 0.2
      %v800 = vmul.f32 %v768, 0.2
      %v801 = vmul.f32 %v769, 0.2
      %v802 = vmul.f32 %v770, 0.2
      %v803 = vmul.f32 %v771, 0.2
      %v804 = vmul.f32 %v772, 0.2
      %v805 = vmul.f32 %v773, 0.2
      %v806 = vmul.f32 %v774, 0.2
      %v807 = vmul.f32 %v775, 0.2
      %v808 = vmul.f32 %v776, 0.2
      %v809 = vmul.f32 %v777, 0.2
      %v810 = vmul.f32 %v778, 0.2
      %v811 = vmul.f32 %v779, 0.2
      %v812 = vsel %vm780, %v764, %v796
      %v813 = vsel %vm781, %v765, %v797
      %v814 = vsel %vm782, %v766, %v798
      %v815 = vsel %vm783, %v767, %v799
      %v816 = vsel %vm784, %v768, %v800
      %v817 = vsel %vm785, %v769, %v801
      %v818 = vsel %vm786, %v770, %v802
      %v819 = vsel %vm787, %v771, %v803
      %v820 = vsel %vm788, %v772, %v804
      %v821 = vsel %vm789, %v773, %v805
      %v822 = vsel %vm790, %v774, %v806
      %v823 = vsel %vm791, %v775, %v807
      %v824 = vsel %vm792, %v776, %v808
      %v825 = vsel %vm793, %v777, %v809
      %v826 = vsel %vm794, %v778, %v810
      %v827 = vsel %vm795, %v779, %v811
      %v828 = vld [vmem:[%s320] sm:$0xff]
      %v829 = vld [vmem:[%s320 + $0x8] sm:$0xff]
      %v830 = vld [vmem:[%s320 + $0x10] sm:$0xff]
      %v831 = vld [vmem:[%s320 + $0x18] sm:$0xff]
      %v832 = vld [vmem:[%s320 + $0x20] sm:$0xff]
      %v833 = vld [vmem:[%s320 + $0x28] sm:$0xff]
      %v834 = vld [vmem:[%s320 + $0x30] sm:$0xff]
      %v835 = vld [vmem:[%s320 + $0x38] sm:$0xff]
      %v836 = vld [vmem:[%s320 + $0x40] sm:$0xff]
      %v837 = vld [vmem:[%s320 + $0x48] sm:$0xff]
      %v838 = vld [vmem:[%s320 + $0x50] sm:$0xff]
      %v839 = vld [vmem:[%s320 + $0x58] sm:$0xff]
      %v840 = vld [vmem:[%s320 + $0x60] sm:$0xff]
      %v841 = vld [vmem:[%s320 + $0x68] sm:$0xff]
      %v842 = vld [vmem:[%s320 + $0x70] sm:$0xff]
      %v843 = vld [vmem:[%s320 + $0x78] sm:$0xff]
      %v844 = vadd.f32 %v812, %v828
      %v845 = vadd.f32 %v813, %v829
      %v846 = vadd.f32 %v814, %v830
      %v847 = vadd.f32 %v815, %v831
      %v848 = vadd.f32 %v816, %v832
      %v849 = vadd.f32 %v817, %v833
      %v850 = vadd.f32 %v818, %v834
      %v851 = vadd.f32 %v819, %v835
      %v852 = vadd.f32 %v820, %v836
      %v853 = vadd.f32 %v821, %v837
      %v854 = vadd.f32 %v822, %v838
      %v855 = vadd.f32 %v823, %v839
      %v856 = vadd.f32 %v824, %v840
      %v857 = vadd.f32 %v825, %v841
      %v858 = vadd.f32 %v826, %v842
      %v859 = vadd.f32 %v827, %v843
      %860 = vmax.xlane.f32.xlu0 %v844
      %v861 = vpop.xlane.xlu0 %860
      %862 = vmax.xlane.f32.xlu0 %v845
      %v863 = vpop.xlane.xlu0 %862
      %864 = vmax.xlane.f32.xlu0 %v846
      %v865 = vpop.xlane.xlu0 %864
      %866 = vmax.xlane.f32.xlu0 %v847
      %v867 = vpop.xlane.xlu0 %866
      %868 = vmax.xlane.f32.xlu0 %v848
      %v869 = vpop.xlane.xlu0 %868
      %870 = vmax.xlane.f32.xlu0 %v849
      %v871 = vpop.xlane.xlu0 %870
      %872 = vmax.xlane.f32.xlu0 %v850
      %v873 = vpop.xlane.xlu0 %872
      %874 = vmax.xlane.f32.xlu0 %v851
      %v875 = vpop.xlane.xlu0 %874
      %876 = vmax.xlane.f32.xlu0 %v852
      %v877 = vpop.xlane.xlu0 %876
      %878 = vmax.xlane.f32.xlu0 %v853
      %v879 = vpop.xlane.xlu0 %878
      %880 = vmax.xlane.f32.xlu0 %v854
      %v881 = vpop.xlane.xlu0 %880
      %882 = vmax.xlane.f32.xlu0 %v855
      %v883 = vpop.xlane.xlu0 %882
      %884 = vmax.xlane.f32.xlu0 %v856
      %v885 = vpop.xlane.xlu0 %884
      %886 = vmax.xlane.f32.xlu0 %v857
      %v887 = vpop.xlane.xlu0 %886
      %888 = vmax.xlane.f32.xlu0 %v858
      %v889 = vpop.xlane.xlu0 %888
      %890 = vmax.xlane.f32.xlu0 %v859
      %v891 = vpop.xlane.xlu0 %890
      %v892 = vsub.f32 %v844, %v861
      %v893 = vsub.f32 %v845, %v863
      %v894 = vsub.f32 %v846, %v865
      %v895 = vsub.f32 %v847, %v867
      %v896 = vsub.f32 %v848, %v869
      %v897 = vsub.f32 %v849, %v871
      %v898 = vsub.f32 %v850, %v873
      %v899 = vsub.f32 %v851, %v875
      %v900 = vsub.f32 %v852, %v877
      %v901 = vsub.f32 %v853, %v879
      %v902 = vsub.f32 %v854, %v881
      %v903 = vsub.f32 %v855, %v883
      %v904 = vsub.f32 %v856, %v885
      %v905 = vsub.f32 %v857, %v887
      %v906 = vsub.f32 %v858, %v889
      %v907 = vsub.f32 %v859, %v891
      %v908 = vmul.f32 %v892, 1.442695
      %v909 = vpow.pop %v908
      %v910 = vmul.f32 %v893, 1.442695
      %v911 = vpow.pop %v910
      %v912 = vmul.f32 %v894, 1.442695
      %v913 = vpow.pop %v912
      %v914 = vmul.f32 %v895, 1.442695
      %v915 = vpow.pop %v914
      %v916 = vmul.f32 %v896, 1.442695
      %v917 = vpow.pop %v916
      %v918 = vmul.f32 %v897, 1.442695
      %v919 = vpow.pop %v918
      %v920 = vmul.f32 %v898, 1.442695
      %v921 = vpow.pop %v920
      %v922 = vmul.f32 %v899, 1.442695
      %v923 = vpow.pop %v922
      %v924 = vmul.f32 %v900, 1.442695
      %v925 = vpow.pop %v924
      %v926 = vmul.f32 %v901, 1.442695
      %v927 = vpow.pop %v926
      %v928 = vmul.f32 %v902, 1.442695
      %v929 = vpow.pop %v928
      %v930 = vmul.f32 %v903, 1.442695
      %v931 = vpow.pop %v930
      %v932 = vmul.f32 %v904, 1.442695
      %v933 = vpow.pop %v932
      %v934 = vmul.f32 %v905, 1.442695
      %v935 = vpow.pop %v934
      %v936 = vmul.f32 %v906, 1.442695
      %v937 = vpow.pop %v936
      %v938 = vmul.f32 %v907, 1.442695
      %v939 = vpow.pop %v938
      %940 = vadd.xlane.f32.xlu0 %v909
      %v941 = vpop.xlane.xlu0 %940
      %942 = vadd.xlane.f32.xlu0 %v911
      %v943 = vpop.xlane.xlu0 %942
      %944 = vadd.xlane.f32.xlu0 %v913
      %v945 = vpop.xlane.xlu0 %944
      %946 = vadd.xlane.f32.xlu0 %v915
      %v947 = vpop.xlane.xlu0 %946
      %948 = vadd.xlane.f32.xlu0 %v917
      %v949 = vpop.xlane.xlu0 %948
      %950 = vadd.xlane.f32.xlu0 %v919
      %v951 = vpop.xlane.xlu0 %950
      %952 = vadd.xlane.f32.xlu0 %v921
      %v953 = vpop.xlane.xlu0 %952
      %954 = vadd.xlane.f32.xlu0 %v923
      %v955 = vpop.xlane.xlu0 %954
      %956 = vadd.xlane.f32.xlu0 %v925
      %v957 = vpop.xlane.xlu0 %956
      %958 = vadd.xlane.f32.xlu0 %v927
      %v959 = vpop.xlane.xlu0 %958
      %960 = vadd.xlane.f32.xlu0 %v929
      %v961 = vpop.xlane.xlu0 %960
      %962 = vadd.xlane.f32.xlu0 %v931
      %v963 = vpop.xlane.xlu0 %962
      %964 = vadd.xlane.f32.xlu0 %v933
      %v965 = vpop.xlane.xlu0 %964
      %966 = vadd.xlane.f32.xlu0 %v935
      %v967 = vpop.xlane.xlu0 %966
      %968 = vadd.xlane.f32.xlu0 %v937
      %v969 = vpop.xlane.xlu0 %968
      %970 = vadd.xlane.f32.xlu0 %v939
      %v971 = vpop.xlane.xlu0 %970
      %v972 = vrcp.pop %v941
      %v973 = vrcp.pop %v943
      %v974 = vrcp.pop %v945
      %v975 = vrcp.pop %v947
      %v976 = vrcp.pop %v949
      %v977 = vrcp.pop %v951
      %v978 = vrcp.pop %v953
      %v979 = vrcp.pop %v955
      %v980 = vrcp.pop %v957
      %v981 = vrcp.pop %v959
      %v982 = vrcp.pop %v961
      %v983 = vrcp.pop %v963
      %v984 = vrcp.pop %v965
      %v985 = vrcp.pop %v967
      %v986 = vrcp.pop %v969
      %v987 = vrcp.pop %v971
      %v988 = vmul.f32 %v909, %v972
      %v989 = vmul.f32 %v911, %v973
      %v990 = vmul.f32 %v913, %v974
      %v991 = vmul.f32 %v915, %v975
      %v992 = vmul.f32 %v917, %v976
      %v993 = vmul.f32 %v919, %v977
      %v994 = vmul.f32 %v921, %v978
      %v995 = vmul.f32 %v923, %v979
      %v996 = vmul.f32 %v925, %v980
      %v997 = vmul.f32 %v927, %v981
      %v998 = vmul.f32 %v929, %v982
      %v999 = vmul.f32 %v931, %v983
      %v1000 = vmul.f32 %v933, %v984
      %v1001 = vmul.f32 %v935, %v985
      %v1002 = vmul.f32 %v937, %v986
      %v1003 = vmul.f32 %v939, %v987
      %v1004 = vpack.c.bf16 %v989, %v988
      %v1005 = vpack.c.bf16 %v991, %v990
      %v1006 = vpack.c.bf16 %v993, %v992
      %v1007 = vpack.c.bf16 %v995, %v994
      %v1008 = vpack.c.bf16 %v997, %v996
      %v1009 = vpack.c.bf16 %v999, %v998
      %v1010 = vpack.c.bf16 %v1001, %v1000
      %v1011 = vpack.c.bf16 %v1003, %v1002
      %v1012 = vpack.c.bf16 %v559, %v556
      %v1013 = vpack.c.bf16 %v567, %v564
      %v1014 = vpack.c.bf16 %v575, %v572
      %v1015 = vpack.c.bf16 %v583, %v580
      %v1016 = vpack.c.bf16 %v591, %v588
      %v1017 = vpack.c.bf16 %v599, %v596
      %v1018 = vpack.c.bf16 %v607, %v604
      %v1019 = vpack.c.bf16 %v615, %v612
      %v1020 = vld [vmem:[%s5] sm:$0x1]
      %v1022 = vlaneseq
      %v1023 = vshrl.u32 %v1022, 7
      %v1024 = vsub.s32 0, %v1023
      %v1025 = vrot.slane %v1020, %v1024
      %1027 = vmatprep.subr.bf16.mxu0 0
      %1028 = vmatpush1.bf16.msra.mxu0 %v1019
      %1029 = vmatprep.subr.bf16.mxu0 0
      %1030 = vmatpush1.bf16.msra.mxu0 %v1018
      %1031 = vmatprep.subr.bf16.mxu0 0
      %1032 = vmatpush1.bf16.msra.mxu0 %v1017
      %1033 = vmatprep.subr.bf16.mxu0 0
      %1034 = vmatpush1.bf16.msra.mxu0 %v1016
      %1035 = vmatprep.subr.bf16.mxu0 0
      %1036 = vmatpush1.bf16.msra.mxu0 %v1015
      %1037 = vmatprep.subr.bf16.mxu0 0
      %1038 = vmatpush1.bf16.msra.mxu0 %v1014
      %1039 = vmatprep.subr.bf16.mxu0 0
      %1040 = vmatpush1.bf16.msra.mxu0 %v1013
      %1041 = vmatprep.subr.bf16.mxu0 0
      %1042 = vmatpush1.bf16.msra.mxu0 %v1012
      %1043 = vmatprep.subr.bf16.mxu0 0
      %1044 = vmatpush2.bf16.msra.mxu0 0
      %1045 = vmatprep.subr.bf16.mxu0 0
      %1046 = vmatpush2.bf16.msra.mxu0 0
      %1047 = vmatprep.subr.bf16.mxu0 0
      %1048 = vmatpush2.bf16.msra.mxu0 0
      %1049 = vmatprep.subr.bf16.mxu0 0
      %1050 = vmatpush2.bf16.msra.mxu0 0
      %1051 = vmatprep.subr.bf16.mxu0 0
      %1052 = vmatpush2.bf16.msra.mxu0 0
      %1053 = vmatprep.subr.bf16.mxu0 0
      %1054 = vmatpush2.bf16.msra.mxu0 0
      %1055 = vmatprep.subr.bf16.mxu0 0
      %1056 = vmatpush2.bf16.msra.mxu0 0
      %1057 = vmatprep.subr.bf16.mxu0 0
      %1058 = vmatpush2.bf16.msra.mxu0 0
      %1059 = vmatprep.mubr.bf16.mxu0 0
      %1060 = vmatmul.mubr.bf16.gmra.mxu0 %v1004
      %v1061 = vpop.f32.mrf.mxu0
      %v1062 = vadd.f32 %v1025, %v1061
      %v1063 = vpop.f32.mrf.mxu0
      %v1064 = vpop.f32.mrf.mxu0
      %v1065 = vadd.f32 %v1025, %v1064
      %v1066 = vpop.f32.mrf.mxu0
      %1067 = vmatprep.mubr.bf16.mxu0 0
      %1068 = vmatmul.mubr.bf16.gmra.mxu0 %v1005
      %v1069 = vpop.f32.mrf.mxu0
      %v1070 = vadd.f32 %v1025, %v1069
      %v1071 = vpop.f32.mrf.mxu0
      %v1072 = vpop.f32.mrf.mxu0
      %v1073 = vadd.f32 %v1025, %v1072
      %v1074 = vpop.f32.mrf.mxu0
      %1075 = vmatprep.mubr.bf16.mxu0 0
      %1076 = vmatmul.mubr.bf16.gmra.mxu0 %v1006
      %v1077 = vpop.f32.mrf.mxu0
      %v1078 = vadd.f32 %v1025, %v1077
      %v1079 = vpop.f32.mrf.mxu0
      %v1080 = vpop.f32.mrf.mxu0
      %v1081 = vadd.f32 %v1025, %v1080
      %v1082 = vpop.f32.mrf.mxu0
      %1083 = vmatprep.mubr.bf16.mxu0 0
      %1084 = vmatmul.mubr.bf16.gmra.mxu0 %v1007
      %v1085 = vpop.f32.mrf.mxu0
      %v1086 = vadd.f32 %v1025, %v1085
      %v1087 = vpop.f32.mrf.mxu0
      %v1088 = vpop.f32.mrf.mxu0
      %v1089 = vadd.f32 %v1025, %v1088
      %v1090 = vpop.f32.mrf.mxu0
      %1091 = vmatprep.mubr.bf16.mxu0 0
      %1092 = vmatmul.mubr.bf16.gmra.mxu0 %v1008
      %v1093 = vpop.f32.mrf.mxu0
      %v1094 = vadd.f32 %v1025, %v1093
      %v1095 = vpop.f32.mrf.mxu0
      %v1096 = vpop.f32.mrf.mxu0
      %v1097 = vadd.f32 %v1025, %v1096
      %v1098 = vpop.f32.mrf.mxu0
      %1099 = vmatprep.mubr.bf16.mxu0 0
      %1100 = vmatmul.mubr.bf16.gmra.mxu0 %v1009
      %v1101 = vpop.f32.mrf.mxu0
      %v1102 = vadd.f32 %v1025, %v1101
      %v1103 = vpop.f32.mrf.mxu0
      %v1104 = vpop.f32.mrf.mxu0
      %v1105 = vadd.f32 %v1025, %v1104
      %v1106 = vpop.f32.mrf.mxu0
      %1107 = vmatprep.mubr.bf16.mxu0 0
      %1108 = vmatmul.mubr.bf16.gmra.mxu0 %v1010
      %v1109 = vpop.f32.mrf.mxu0
      %v1110 = vadd.f32 %v1025, %v1109
      %v1111 = vpop.f32.mrf.mxu0
      %v1112 = vpop.f32.mrf.mxu0
      %v1113 = vadd.f32 %v1025, %v1112
      %v1114 = vpop.f32.mrf.mxu0
      %1115 = vmatprep.mubr.bf16.mxu0 0
      %1116 = vmatmul.mubr.bf16.gmra.mxu0 %v1011
      %v1117 = vpop.f32.mrf.mxu0
      %v1118 = vadd.f32 %v1025, %v1117
      %v1119 = vpop.f32.mrf.mxu0
      %v1120 = vpop.f32.mrf.mxu0
      %v1121 = vadd.f32 %v1025, %v1120
      %v1122 = vpop.f32.mrf.mxu0
      %1123 = vdwg.mxu0
      %v1124 = vmax.f32 %v1062, 0.0
      %v1125 = vmax.f32 %v1065, 0.0
      %v1126 = vmax.f32 %v1070, 0.0
      %v1127 = vmax.f32 %v1073, 0.0
      %v1128 = vmax.f32 %v1078, 0.0
      %v1129 = vmax.f32 %v1081, 0.0
      %v1130 = vmax.f32 %v1086, 0.0
      %v1131 = vmax.f32 %v1089, 0.0
      %v1132 = vmax.f32 %v1094, 0.0
      %v1133 = vmax.f32 %v1097, 0.0
      %v1134 = vmax.f32 %v1102, 0.0
      %v1135 = vmax.f32 %v1105, 0.0
      %v1136 = vmax.f32 %v1110, 0.0
      %v1137 = vmax.f32 %v1113, 0.0
      %v1138 = vmax.f32 %v1118, 0.0
      %v1139 = vmax.f32 %v1121, 0.0
      %v1140 = vld [vmem:[%s6] sm:$0xff]
      %v1141 = vld [vmem:[%s6 + $0x8] sm:$0xff]
      %v1142 = vld [vmem:[%s6 + $0x10] sm:$0xff]
      %v1143 = vld [vmem:[%s6 + $0x18] sm:$0xff]
      %v1144 = vld [vmem:[%s6 + $0x20] sm:$0xff]
      %v1145 = vld [vmem:[%s6 + $0x28] sm:$0xff]
      %v1146 = vld [vmem:[%s6 + $0x30] sm:$0xff]
      %v1147 = vld [vmem:[%s6 + $0x38] sm:$0xff]
      %v1148 = vld [vmem:[%s6 + $0x40] sm:$0xff]
      %v1149 = vld [vmem:[%s6 + $0x48] sm:$0xff]
      %v1150 = vld [vmem:[%s6 + $0x50] sm:$0xff]
      %v1151 = vld [vmem:[%s6 + $0x58] sm:$0xff]
      %v1152 = vld [vmem:[%s6 + $0x60] sm:$0xff]
      %v1153 = vld [vmem:[%s6 + $0x68] sm:$0xff]
      %v1154 = vld [vmem:[%s6 + $0x70] sm:$0xff]
      %v1155 = vld [vmem:[%s6 + $0x78] sm:$0xff]
      %v1156 = vmul.f32 %v1124, %v1140
      %v1157 = vmul.f32 %v1125, %v1141
      %v1158 = vmul.f32 %v1126, %v1142
      %v1159 = vmul.f32 %v1127, %v1143
      %v1160 = vmul.f32 %v1128, %v1144
      %v1161 = vmul.f32 %v1129, %v1145
      %v1162 = vmul.f32 %v1130, %v1146
      %v1163 = vmul.f32 %v1131, %v1147
      %v1164 = vmul.f32 %v1132, %v1148
      %v1165 = vmul.f32 %v1133, %v1149
      %v1166 = vmul.f32 %v1134, %v1150
      %v1167 = vmul.f32 %v1135, %v1151
      %v1168 = vmul.f32 %v1136, %v1152
      %v1169 = vmul.f32 %v1137, %v1153
      %v1170 = vmul.f32 %v1138, %v1154
      %v1171 = vmul.f32 %v1139, %v1155
      %1172 = vadd.xlane.f32.xlu0 %v1156
      %v1173 = vpop.xlane.xlu0 %1172
      %1174 = vadd.xlane.f32.xlu0 %v1157
      %v1175 = vpop.xlane.xlu0 %1174
      %1176 = vadd.xlane.f32.xlu0 %v1158
      %v1177 = vpop.xlane.xlu0 %1176
      %1178 = vadd.xlane.f32.xlu0 %v1159
      %v1179 = vpop.xlane.xlu0 %1178
      %1180 = vadd.xlane.f32.xlu0 %v1160
      %v1181 = vpop.xlane.xlu0 %1180
      %1182 = vadd.xlane.f32.xlu0 %v1161
      %v1183 = vpop.xlane.xlu0 %1182
      %1184 = vadd.xlane.f32.xlu0 %v1162
      %v1185 = vpop.xlane.xlu0 %1184
      %1186 = vadd.xlane.f32.xlu0 %v1163
      %v1187 = vpop.xlane.xlu0 %1186
      %1188 = vadd.xlane.f32.xlu0 %v1164
      %v1189 = vpop.xlane.xlu0 %1188
      %1190 = vadd.xlane.f32.xlu0 %v1165
      %v1191 = vpop.xlane.xlu0 %1190
      %1192 = vadd.xlane.f32.xlu0 %v1166
      %v1193 = vpop.xlane.xlu0 %1192
      %1194 = vadd.xlane.f32.xlu0 %v1167
      %v1195 = vpop.xlane.xlu0 %1194
      %1196 = vadd.xlane.f32.xlu0 %v1168
      %v1197 = vpop.xlane.xlu0 %1196
      %1198 = vadd.xlane.f32.xlu0 %v1169
      %v1199 = vpop.xlane.xlu0 %1198
      %1200 = vadd.xlane.f32.xlu0 %v1170
      %v1201 = vpop.xlane.xlu0 %1200
      %1202 = vadd.xlane.f32.xlu0 %v1171
      %v1203 = vpop.xlane.xlu0 %1202
      %v1204 = vadd.f32 %v1173, %v1175
      %v1205 = vadd.f32 %v1204, %v1177
      %v1206 = vadd.f32 %v1205, %v1179
      %v1207 = vadd.f32 %v1206, %v1181
      %v1208 = vadd.f32 %v1207, %v1183
      %v1209 = vadd.f32 %v1208, %v1185
      %v1210 = vadd.f32 %v1209, %v1187
      %v1211 = vadd.f32 %v1210, %v1189
      %v1212 = vadd.f32 %v1211, %v1191
      %v1213 = vadd.f32 %v1212, %v1193
      %v1214 = vadd.f32 %v1213, %v1195
      %v1215 = vadd.f32 %v1214, %v1197
      %v1216 = vadd.f32 %v1215, %v1199
      %v1217 = vadd.f32 %v1216, %v1201
      %v1218 = vadd.f32 %v1217, %v1203
      %v1219 = vrot.slane %v1218, 4
      %v1220 = vadd.f32 %v1218, %v1219
      %v1221 = vrot.slane %v1220, 2
      %v1222 = vadd.f32 %v1220, %v1221
      %v1223 = vrot.slane %v1222, 1
      %v1224 = vadd.f32 %v1222, %v1223
      %v1225 = vld [vmem:[#allocation2] sm:$0x1]
      %v1226 = vadd.f32 %v1224, %v1225
      %v1227 = vsub.f32 0.0, %v1226
      %v1228 = vmul.f32 %v1227, 1.442695
      %v1229 = vpow.pop %v1228
      %v1230 = vadd.f32 %v1229, 1.0
      %v1231 = vrcp.pop %v1230
      %v1232 = vmul.f32 1.0, %v1231
      %1234 = vset.pattern.permute.xlu0 0
      %1235 = vperm.xlu0 %1234, %v1232
      %v1236 = vpop.permute.xlu0 %1235
      %v1238 = vlaneseq
      %v1239 = vshrl.u32 %v1238, 7
      %v1240 = vsub.s32 0, %v1239
      %v1241 = vrot.slane %v1236, %v1240
      %1242 = vst [vmem:[%s323] sm:$0x1] %v1241
      %p1243 = scmp.lt.s32.totalorder %s21, 1
      %s1244 = scalar_select %p1243, %s21, 1
      %s1245 = scalar_lea.vmem %s8, %s1244
      // Predicated region
      $region53: #{gat_forward.1} parent=51 // pred_check
        %p1246 = pneg %p217
      $region54: #{gat_forward.1} parent=51 // pred_check_branch
        %1248 = sbr.rel (%p1246) target = $region56
      $region55: #{gat_forward.1} parent=51 // pred_region
        _
      $region56: #{gat_forward.1} parent=51 // pred_fallthru
        _
    $region52: #{gat_forward.1} parent=5 // pred_fallthru
      _
    %p1249 = scmp.le.s32.totalorder 2, %s16
    // Predicated region
    $region57: #{gat_forward.1} parent=5 // pred_check
      %p1250 = pneg %p1249
    $region58: #{gat_forward.1} parent=5 // pred_check_branch
      %1252 = sbr.rel (%p1250) target = $region60
    $region59: #{gat_forward.1} parent=5 // pred_region
      %s1253 = ssub.s32 %s16, 2
      // Predicated region
      $region61: #{gat_forward.1} parent=59 // pred_check
        %p1254 = pneg %p223
      $region62: #{gat_forward.1} parent=59 // pred_check_branch
        %1256 = sbr.rel (%p1254) target = $region64
      $region63: #{gat_forward.1} parent=59 // pred_region
        %p1257 = scmp.lt.s32.totalorder %s22, 1
        %s1258 = scalar_select %p1257, %s22, 1
        %s1259 = scalar_lea.vmem %s8, %s1258
      $region64: #{gat_forward.1} parent=59 // pred_fallthru
        _
    $region60: #{gat_forward.1} parent=5 // pred_fallthru
      _
  $region6: #{gat_forward.1} parent=0 // loop_footer
    %s20 = sadd.s32 1, %s16
  $region7: #{gat_forward.1} parent=0 // loop_footer_branch
    %15 = sbr.rel target = $region3
  $region8: #{gat_forward.1} parent=0 // loop_exit
    _

</llo_original>
